<compile_context>
chip_gen: v7x
topology: tpu7x:2x2x1
jax: 0.10.0
libtpu: 0.0.40
codegen_flags: <defaults>
</compile_context>

<pallas_src>
import math

import jax
import jax.numpy as jnp
from jax.experimental import pallas as pl
from jax.experimental.pallas import tpu as pltpu

_LANE_CHOICES = (1024, 512, 256, 128)   # preferred slab widths (multiples of 128)
_MIN_TILE_BYTES = 2 << 20               # never go below 2 MiB tiles
_MAX_TILE_BYTES = 8 << 20               # plateau: >8 MiB buys nothing


def _round_up(x, m):
    return ((x + m - 1) // m) * m


def _round_down(x, m):
    return (x // m) * m


def _vmem_budget():
    """Generation-aware (target_tile_bytes, vmem_limit_bytes)."""
    try:
        cap = int(pltpu.get_tpu_info().vmem_capacity_bytes)
    except Exception:  # pragma: no cover - conservative fallback
        cap = 64 << 20                       # v7x-sized assumption (safe everywhere)
    tile_bytes = max(_MIN_TILE_BYTES, min(_MAX_TILE_BYTES, cap // 16))
    # 2 specs x 2 buffers x tile must fit with headroom; never exceed ~half VMEM.
    vmem_limit = min(cap // 2, 48 << 20)
    return tile_bytes, vmem_limit


def _constants(midpoint, growth):
    # sigmoid(z) = 0.5*(1 + tanh(z/2))  =>  out = a*tanh(c1*x + c2) + b (exact)
    mid = float(midpoint)
    g = float(growth)

    def _sig(z):
        return 1.0 / (1.0 + math.exp(-z))

    low = _sig(-mid * g)
    scale = _sig((1.0 - mid) * g) - low
    inv = 1.0 / scale
    a = 0.5 * inv
    b = (0.5 - low) * inv
    c1 = 0.5 * g
    c2 = -0.5 * g * mid
    return a, b, c1, c2


def _make_kernel(a, b, c1, c2):
    """Elementwise kernel with the affine/tanh constants baked in."""

    def kernel(x_ref, o_ref):
        x = x_ref[...].astype(jnp.float32)
        o_ref[...] = (a * jnp.tanh(c1 * x + c2) + b).astype(o_ref.dtype)

    return kernel


def _apply_jnp(x, a, b, c1, c2):
    """Same math in plain jnp (used for tiny tensors / <128-element tails)."""
    y = a * jnp.tanh(c1 * x.astype(jnp.float32) + c2) + b
    return y.astype(x.dtype)


def _launch_2d(x2d, a, b, c1, c2):
    """Run the Pallas kernel over a lane-dense (rows, lanes) slab."""
    rows, lanes = x2d.shape
    itemsize = jnp.dtype(x2d.dtype).itemsize
    tile_bytes, vmem_limit = _vmem_budget()

    if rows <= 8:
        # Full-extent block is always legal, even when rows < 8.
        tile_r = rows
    else:
        # Byte-targeted row tile (multiple of 8), independent of lane width.
        target_rows = max(8, _round_down(tile_bytes // (lanes * itemsize), 8))
        # Guarantee >=2 grid steps so v7x megacore gets both TensorCores busy.
        half_rows = _round_up(pl.cdiv(rows, 2), 8)
        tile_r = min(target_rows, half_rows)
    grid = (pl.cdiv(rows, tile_r),)

    n = rows * lanes
    cost = pl.CostEstimate(
        flops=4 * n,                       # ~1 fma inside tanh arg + 1 fma outside
        transcendentals=n,                 # one tanh per element
        bytes_accessed=2 * n * itemsize,   # read + write, original dtype
    )

    return pl.pallas_call(
        _make_kernel(a, b, c1, c2),
        out_shape=jax.ShapeDtypeStruct((rows, lanes), x2d.dtype),
        grid=grid,
        in_specs=[pl.BlockSpec((tile_r, lanes), lambda i: (i, 0))],
        out_specs=pl.BlockSpec((tile_r, lanes), lambda i: (i, 0)),
        compiler_params=pltpu.CompilerParams(
            dimension_semantics=("parallel",),
            vmem_limit_bytes=vmem_limit,
        ),
        cost_estimate=cost,
    )(x2d)


def logit_transform(e, midpoint, growth=10.0):
    """Pallas TPU implementation of LogitTransform.forward."""
    orig_shape = e.shape
    a, b, c1, c2 = _constants(midpoint, growth)

    flat = e.reshape(-1)
    n = flat.size
    if n == 0:
        return e

    # Widest lane count that divides n -> zero padding, lane-dense stores.
    lanes = next((L for L in _LANE_CHOICES if n % L == 0), None)
    if lanes is not None:
        out2d = _launch_2d(flat.reshape(n // lanes, lanes), a, b, c1, c2)
        return out2d.reshape(orig_shape)

    # Fallback: n not a multiple of 128. Run the kernel on the 128-aligned
    # head and evaluate the (<128-element) tail in plain jnp. This replaces
    # the old jnp.pad + reshape(-1)[:n] epilogue (two extra full HBM passes).
    lanes = 128
    head = _round_down(n, lanes)
    if head == 0:
        return _apply_jnp(flat, a, b, c1, c2).reshape(orig_shape)
    head_out = _launch_2d(flat[:head].reshape(head // lanes, lanes), a, b, c1, c2)
    tail_out = _apply_jnp(flat[head:], a, b, c1, c2)
    return jnp.concatenate([head_out.reshape(-1), tail_out]).reshape(orig_shape)


def _reference(e, midpoint, growth=10.0):
    mid = jnp.float32(midpoint)
    g = jnp.float32(growth)
    low = jax.nn.sigmoid(-mid * g)
    scale = jax.nn.sigmoid((1.0 - mid) * g) - low
    return ((jax.nn.sigmoid((e.astype(jnp.float32) - mid) * g) - low) / scale
            ).astype(e.dtype)


if __name__ == "__main__":
    midpoint, growth = 0.3, 10.0

    # Module is elementwise over an image-like tensor (NCHW).
    x = jax.random.uniform(jax.random.PRNGKey(0), (2, 4, 16, 16), dtype=jnp.float32)
    out = jax.block_until_ready(logit_transform(x, midpoint, growth))
    ref = _reference(x, midpoint, growth)
    assert out.shape == x.shape and out.dtype == x.dtype
    assert jnp.allclose(out, ref, atol=1e-5, rtol=1e-5), "mismatch vs reference"

    # Exercise the non-multiple-of-128 fallback (kernel head + jnp tail).
    x2 = jax.random.uniform(jax.random.PRNGKey(1), (3, 5, 47), dtype=jnp.float32)
    out2 = jax.block_until_ready(logit_transform(x2, midpoint, growth))
    ref2 = _reference(x2, midpoint, growth)
    assert out2.shape == x2.shape and out2.dtype == x2.dtype
    assert jnp.allclose(out2, ref2, atol=1e-5, rtol=1e-5), "mismatch (tail path)"

    print("KERNEL_OK")
</pallas_src>

<mosaic_0001>
module attributes {stable_mosaic.version = 11 : i64} {
  func.func @kernel(%arg0: i32, %arg1: memref<2x1024xf32, #tpu.memory_space<vmem>>, %arg2: memref<2x1024xf32, #tpu.memory_space<vmem>>) attributes {dimension_semantics = [#tpu.dimension_semantics<parallel>], iteration_bounds = array<i64: 1>, scalar_prefetch = 0 : i64, scratch_operands = 0 : i64, tpu.core_type = #tpu.core_type<tc>, window_params = [{transform_indices = @transform_0, window_bounds = array<i64: 2, 1024>}, {transform_indices = @transform_1, window_bounds = array<i64: 2, 1024>}]} {
    %c0 = arith.constant 0 : index
    %c0_0 = arith.constant 0 : index
    %0 = vector.load %arg1[%c0, %c0_0] : memref<2x1024xf32, #tpu.memory_space<vmem>>, vector<2x1024xf32>
    %cst = arith.constant 5.000000e+00 : f32
    %1 = vector.broadcast %cst : f32 to vector<2x1024xf32>
    %2 = arith.mulf %1, %0 : vector<2x1024xf32>
    %cst_1 = arith.constant -1.500000e+00 : f32
    %3 = vector.broadcast %cst_1 : f32 to vector<2x1024xf32>
    %4 = arith.addf %2, %3 : vector<2x1024xf32>
    %5 = math.tanh %4 : vector<2x1024xf32>
    %cst_2 = arith.constant 0.525396049 : f32
    %6 = vector.broadcast %cst_2 : f32 to vector<2x1024xf32>
    %7 = arith.mulf %6, %5 : vector<2x1024xf32>
    %cst_3 = arith.constant 0.475561291 : f32
    %8 = vector.broadcast %cst_3 : f32 to vector<2x1024xf32>
    %9 = arith.addf %7, %8 : vector<2x1024xf32>
    %c0_4 = arith.constant 0 : index
    %c0_5 = arith.constant 0 : index
    %10 = vector.load %arg2[%c0_4, %c0_5] : memref<2x1024xf32, #tpu.memory_space<vmem>>, vector<2x1024xf32>
    tpu.vector_store %arg2[%c0_4, %c0_5], %9 {strides = array<i32>} : memref<2x1024xf32, #tpu.memory_space<vmem>>, vector<2x1024xf32>,
    return
  }
  func.func @transform_0(%arg0: i32) -> (i32, i32) {
    %c0_i32 = arith.constant 0 : i32
    %c0_i32_0 = arith.constant 0 : i32
    return %arg0, %c0_i32 : i32, i32
  }
  func.func @transform_1(%arg0: i32) -> (i32, i32) {
    %c0_i32 = arith.constant 0 : i32
    %c0_i32_0 = arith.constant 0 : i32
    return %arg0, %c0_i32 : i32, i32
  }
}

</mosaic_0001>

<llo_original>
// kernel: tpu_custom_call.1
$region0: #{tpu_custom_call.1}
  #allocation0 [shape = 'u32[]', space=smem, size = 0x4, offset = 0x4, fixed_abs, tag = 'smem constant byte address 0x4 - core index']
  #allocation1 [shape = 'u32[144,128]{1,0:T(1,128)}', space=vmem, size = 0x12000, scoped, tag = 'internal scratch']
  %s0 = inlined_call_operand.hbm [shape: f32[2,1024], index: 0, kind: input, shape index: {}]
  %s1 = inlined_call_operand.hbm [shape: f32[2,1024], index: 1, kind: output, shape index: {}]
  %s2 = sld [smem:[#allocation0]]
  $region18: #{tpu_custom_call.1} parent=0
    _
  %s4 = ssub.s32 1, %s2
  %s5 = scalar_select 0, %s4, %s2
  $region1: #{tpu_custom_call.1} parent=0
    #allocation2 [shape = 'u8[8192]{0}', space=vmem, size = 0x2000, scoped, tag = 'input window, operand 0, single buffered']
    #allocation3 [shape = 's32[1]{0}', space=sflag, size = 0x4, scoped, tag = 'scoped memory for tpu_custom_call.1']
    #allocation4 [shape = 's32[1]{0}', space=sflag, size = 0x4, scoped, tag = 'scoped memory for tpu_custom_call.1']
    #allocation5 [shape = 'u8[8192]{0}', space=vmem, size = 0x2000, scoped, tag = 'output window, operand 0, single buffered']
    %6 = vsyncpa [#allocation3], 0
    %7 = vsyncpa [#allocation4], 0
    // Predicated region
    $region2: #{tpu_custom_call.1} parent=1 // pred_check
      _
    $region3: #{tpu_custom_call.1} parent=1 // pred_check_branch
      %9 = sbr.rel (0) target = $region5
    $region4: #{tpu_custom_call.1} parent=1 // pred_region
      %s11 = ssub.s32 256, 256
      %12 = vsyncadd [#allocation3], %s11
      %s14 = sshll.u32 [#allocation2], 4
      %s15 = int_to_ptr.vmem [resolvable:$true] %s14
      %17 = dma.hbm_to_vmem [thread:$0]  %s0, 256, %s15, [#allocation3]
    $region5: #{tpu_custom_call.1} parent=1 // pred_fallthru
      _
    // Predicated region
    $region6: #{tpu_custom_call.1} parent=1 // pred_check
      _
    $region7: #{tpu_custom_call.1} parent=1 // pred_check_branch
      %19 = sbr.rel (0) target = $region9
    $region8: #{tpu_custom_call.1} parent=1 // pred_region
      %20 = dma.done [#allocation3], 256
    $region9: #{tpu_custom_call.1} parent=1 // pred_fallthru
      _
    %v21 = vld [vmem:[#allocation2] sm:$0xff]
    %v22 = vld [vmem:[#allocation2 + $0x8] sm:$0xff]
    %v23 = vmul.f32 %v21, 5.0
    %v24 = vmul.f32 %v22, 5.0
    %v25 = vadd.f32 %v23, -1.5
    %v26 = vadd.f32 %v24, -1.5
    %v27 = vtanh.pop %v25
    %v28 = vtanh.pop %v26
    %v29 = vmul.f32 %v27, 0.52539605
    %v30 = vmul.f32 %v28, 0.52539605
    %v31 = vadd.f32 %v29, 0.4755613
    %v32 = vadd.f32 %v30, 0.4755613
    %33 = vst [vmem:[#allocation5] sm:$0xff] %v31
    %34 = vst [vmem:[#allocation5 + $0x8] sm:$0xff] %v32
    // Predicated region
    $region10: #{tpu_custom_call.1} parent=1 // pred_check
      _
    $region11: #{tpu_custom_call.1} parent=1 // pred_check_branch
      %36 = sbr.rel (0) target = $region13
    $region12: #{tpu_custom_call.1} parent=1 // pred_region
      %s38 = ssub.s32 256, 256
      %39 = vsyncadd [#allocation4], %s38
      %s41 = sshll.u32 [#allocation5], 4
      %s42 = int_to_ptr.vmem [resolvable:$true] %s41
      %44 = dma.vmem_to_hbm [thread:$0]  %s42, 256, %s1, [#allocation4]
    $region13: #{tpu_custom_call.1} parent=1 // pred_fallthru
      _
    // Predicated region
    $region14: #{tpu_custom_call.1} parent=1 // pred_check
      _
    $region15: #{tpu_custom_call.1} parent=1 // pred_check_branch
      %46 = sbr.rel (0) target = $region17
    $region16: #{tpu_custom_call.1} parent=1 // pred_region
      %47 = dma.done [#allocation4], 256
    $region17: #{tpu_custom_call.1} parent=1 // pred_fallthru
      _
    %48 = vsyncpa [#allocation3], 1
    %49 = vsyncpa [#allocation4], 1

</llo_original>
